<compile_context>
chip_gen: v7x
topology: tpu7x:2x2x1
jax: 0.10.0
libtpu: 0.0.40
codegen_flags: <defaults>
</compile_context>

<pallas_src>
import functools

import numpy as np
import jax
import jax.numpy as jnp
from jax.experimental import pallas as pl
from jax.experimental.pallas import tpu as pltpu


# ---------------------------------------------------------------------------
# Frozen sinusoid position-encoding table (matches the PyTorch reference)
# ---------------------------------------------------------------------------
def get_position_encoding_table(n_position, d_hid, padding_idx=None):
    pos = np.arange(n_position, dtype=np.float64)[:, None]
    hid = np.arange(d_hid, dtype=np.float64)[None, :]
    angle = pos / np.power(10000.0, 2.0 * np.floor(hid / 2.0) / d_hid)
    table = np.array(angle)
    table[:, 0::2] = np.sin(angle[:, 0::2])
    table[:, 1::2] = np.cos(angle[:, 1::2])
    if padding_idx is not None:
        table[padding_idx] = 0.0
    return jnp.asarray(table, jnp.float32)


# ---------------------------------------------------------------------------
# Kernel: one row-chunk (text rows + image rows) per grid step, ONE matmul
# ---------------------------------------------------------------------------
def _emb_kernel(tids_ref, iids_ref, ximg_ref, w_ref, text_ref, img_ref,
                *, vocab, n_pos):
    del n_pos  # offsets are baked into the combined table layout
    rows_t = text_ref.shape[0]
    rows_i = img_ref.shape[0]
    k_tot = w_ref.shape[0]

    # Hoisted lane iota(s): built once, reused for all seven compares.
    lane_t = jax.lax.broadcasted_iota(jnp.int32, (rows_t, k_tot), 1)
    lane_i = (lane_t if rows_i == rows_t
              else jax.lax.broadcasted_iota(jnp.int32, (rows_i, k_tot), 1))

    tids = tids_ref[...]        # (rows_t, 4) int32: [input, turn, speaker, pos]
    iids = iids_ref[...]        # (rows_i, 3) int32: [turn, speaker, pos]

    def oh(ids, col, lane, offset=0):
        return (lane == (ids[:, col:col + 1] + offset)).astype(jnp.float32)

    # text = emb(input) + emb(turn) + emb(speaker) + pos_enc(pos)
    #      -> summed one-hots over [W_tok ; P_pos] rows (linearity)
    oh_text = (oh(tids, 0, lane_t) + oh(tids, 1, lane_t) + oh(tids, 2, lane_t)
               + oh(tids, 3, lane_t, offset=vocab))

    # image = image_input @ W_img^T + emb(turn) + emb(speaker) + emb(pos)
    # ximg_ref already carries the features in lanes [V+NPOS, V+NPOS+Din),
    # disjoint from the one-hot lanes, so a single add fuses both LHS parts.
    img_lhs = (oh(iids, 0, lane_i) + oh(iids, 1, lane_i) + oh(iids, 2, lane_i)
               + ximg_ref[...])

    # Stack text and image rows -> ONE MXU push per grid step.
    lhs = jnp.concatenate([oh_text, img_lhs], axis=0)        # (rows_t+rows_i, K)
    out = jnp.dot(lhs, w_ref[...], preferred_element_type=jnp.float32)
    text_ref[...] = out[:rows_t]
    img_ref[...] = out[rows_t:]


# ---------------------------------------------------------------------------
# Wrapper (packing, padding, BlockSpecs / grid); mirrors the PyTorch forward
# ---------------------------------------------------------------------------
def emb_forward(params, src_input, src_pos, src_turn, src_speaker,
                image_input, image_pos, image_turn, image_speaker):
    w_tok, pos_tab, w_img = params["w_tok"], params["pos_tab"], params["w_img"]
    V, D = w_tok.shape
    NPOS = pos_tab.shape[0]
    Din = w_img.shape[0]
    B, Ls = src_input.shape
    _, Li, _ = image_input.shape

    k_used = V + NPOS + Din
    K = ((k_used + 127) // 128) * 128     # contraction padded to 128 lanes

    # Combined weight: [W_tok ; P_pos ; W_img^T ; zero-pad] -> (K, D)
    w_all = jnp.concatenate([w_tok, pos_tab, w_img], axis=0)
    w_all = jnp.pad(w_all, ((0, K - k_used), (0, 0)))

    rows_t, rows_i = B * Ls, B * Li

    # Pack the 7 id tensors into 2 int32 inputs (2 small DMAs per step).
    tids = jnp.stack([src_input, src_turn, src_speaker, src_pos],
                     axis=-1).astype(jnp.int32).reshape(rows_t, 4)
    iids = jnp.stack([image_turn, image_speaker, image_pos],
                     axis=-1).astype(jnp.int32).reshape(rows_i, 3)

    # Image features pre-placed in their lane window [V+NPOS, V+NPOS+Din).
    ximg = jnp.pad(image_input.reshape(rows_i, Din).astype(jnp.float32),
                   ((0, 0), (V + NPOS, K - V - NPOS - Din)))

    # Grid: 2 "parallel" row-chunks (v7x has 2 TCs); collapse to a single
    # step if the row counts don't split into multiple-of-8-row chunks.
    nc = 2 if (rows_t % 16 == 0 and rows_i % 16 == 0) else 1
    ct, ci = rows_t // nc, rows_i // nc

    text_flat, img_flat = pl.pallas_call(
        functools.partial(_emb_kernel, vocab=V, n_pos=NPOS),
        grid=(nc,),
        in_specs=[
            pl.BlockSpec((ct, 4), lambda c: (c, 0)),     # packed text ids
            pl.BlockSpec((ci, 3), lambda c: (c, 0)),     # packed image ids
            pl.BlockSpec((ci, K), lambda c: (c, 0)),     # lane-placed image feats
            # Combined weight table stays VMEM-resident (constant block index).
            # TODO(synk): if vocab*D is scaled up, switch the table to bf16 /
            # single-buffering to respect v7x's 64 MiB VMEM budget.
            pl.BlockSpec((K, D), lambda c: (0, 0)),
        ],
        out_specs=[
            pl.BlockSpec((ct, D), lambda c: (c, 0)),     # text output rows
            pl.BlockSpec((ci, D), lambda c: (c, 0)),     # image output rows
        ],
        out_shape=[
            jax.ShapeDtypeStruct((rows_t, D), jnp.float32),
            jax.ShapeDtypeStruct((rows_i, D), jnp.float32),
        ],
        compiler_params=pltpu.CompilerParams(
            dimension_semantics=("parallel",)),
    )(tids, iids, ximg, w_all)

    return text_flat.reshape(B, Ls, D), img_flat.reshape(B, Li, D)


# ---------------------------------------------------------------------------
# Pure-JAX reference (gather-based) for verification
# ---------------------------------------------------------------------------
def ref_forward(params, src_input, src_pos, src_turn, src_speaker,
                image_input, image_pos, image_turn, image_speaker):
    w_tok, pos_tab, w_img = params["w_tok"], params["pos_tab"], params["w_img"]
    emb = lambda ids: w_tok[ids]
    text = emb(src_input) + emb(src_turn) + emb(src_speaker) + pos_tab[src_pos]
    image = (jnp.einsum("bld,de->ble", image_input, w_img)
             + emb(image_turn) + emb(image_speaker) + emb(image_pos))
    return text, image


if __name__ == "__main__":
    max_text_len = 31          # -> position table has 32 rows
    image_in_size = 32
    vocab_size = 32
    embedding_size = 128       # lane-dense output width
    padding_id = 0
    B, Ls, Li = 2, 8, 8

    key = jax.random.PRNGKey(0)
    k_w, k_in = jax.random.split(key)
    k_tok, k_img = jax.random.split(k_w)

    # nn.Embedding init ~ N(0,1), padding_idx row zeroed (frozen at init).
    w_tok = jax.random.normal(k_tok, (vocab_size, embedding_size), jnp.float32)
    w_tok = w_tok.at[padding_id].set(0.0)
    # Frozen sinusoid position table, padding_idx=0 row zeroed.
    pos_tab = get_position_encoding_table(max_text_len + 1, embedding_size,
                                          padding_idx=0)
    # nn.Linear(image_in, emb, bias=False), stored pre-transposed (Din, D).
    bound = 1.0 / np.sqrt(image_in_size)
    w_img = jax.random.uniform(k_img, (image_in_size, embedding_size),
                               jnp.float32, -bound, bound)
    params = dict(w_tok=w_tok, pos_tab=pos_tab, w_img=w_img)
    # TODO(synk): tgt_token_emb (weight-shared with src_token_emb) is defined in
    # the module but unused in forward, so it is not materialized here.

    ks = jax.random.split(k_in, 8)
    src_input = jax.random.randint(ks[0], (B, Ls), 0, vocab_size)
    src_turn = jax.random.randint(ks[1], (B, Ls), 0, vocab_size)
    src_speaker = jax.random.randint(ks[2], (B, Ls), 0, vocab_size)
    src_pos = jax.random.randint(ks[3], (B, Ls), 0, max_text_len + 1)
    image_input = jax.random.normal(ks[4], (B, Li, image_in_size), jnp.float32)
    image_turn = jax.random.randint(ks[5], (B, Li), 0, vocab_size)
    image_speaker = jax.random.randint(ks[6], (B, Li), 0, vocab_size)
    image_pos = jax.random.randint(ks[7], (B, Li), 0, vocab_size)  # token table

    fwd = jax.jit(emb_forward)
    text_out, image_out = fwd(params, src_input, src_pos, src_turn, src_speaker,
                              image_input, image_pos, image_turn, image_speaker)
    jax.block_until_ready((text_out, image_out))

    t_ref, i_ref = ref_forward(params, src_input, src_pos, src_turn, src_speaker,
                               image_input, image_pos, image_turn, image_speaker)

    assert text_out.shape == (B, Ls, embedding_size)
    assert image_out.shape == (B, Li, embedding_size)
    assert bool(jnp.all(jnp.isfinite(text_out)))
    assert bool(jnp.all(jnp.isfinite(image_out)))
    assert np.allclose(np.asarray(text_out), np.asarray(t_ref),
                       atol=1e-4, rtol=1e-4)
    assert np.allclose(np.asarray(image_out), np.asarray(i_ref),
                       atol=1e-4, rtol=1e-4)
    print("KERNEL_OK")
</pallas_src>

<mosaic_0001>
module attributes {stable_mosaic.version = 11 : i64} {
  func.func @_emb_kernel(%arg0: i32, %arg1: memref<8x4xi32, #tpu.memory_space<vmem>>, %arg2: memref<8x3xi32, #tpu.memory_space<vmem>>, %arg3: memref<8x128xf32, #tpu.memory_space<vmem>>, %arg4: memref<128x128xf32, #tpu.memory_space<vmem>>, %arg5: memref<8x128xf32, #tpu.memory_space<vmem>>, %arg6: memref<8x128xf32, #tpu.memory_space<vmem>>) attributes {dimension_semantics = [#tpu.dimension_semantics<parallel>], iteration_bounds = array<i64: 2>, scalar_prefetch = 0 : i64, scratch_operands = 0 : i64, tpu.core_type = #tpu.core_type<tc>, window_params = [{transform_indices = @transform_0, window_bounds = array<i64: 8, 4>}, {transform_indices = @transform_1, window_bounds = array<i64: 8, 3>}, {transform_indices = @transform_2, window_bounds = array<i64: 8, 128>}, {pipeline_mode = #tpu.pipeline_mode<synchronous>, transform_indices = @transform_3, window_bounds = array<i64: 128, 128>}, {transform_indices = @transform_4, window_bounds = array<i64: 8, 128>}, {transform_indices = @transform_5, window_bounds = array<i64: 8, 128>}]} {
    %0 = tpu.iota {dimensions = array<i32: 1>} : vector<8x128xi32>
    %c0 = arith.constant 0 : index
    %c0_0 = arith.constant 0 : index
    %1 = vector.load %arg1[%c0, %c0_0] : memref<8x4xi32, #tpu.memory_space<vmem>>, vector<8x4xi32>
    %c0_1 = arith.constant 0 : index
    %c0_2 = arith.constant 0 : index
    %2 = vector.load %arg2[%c0_1, %c0_2] : memref<8x3xi32, #tpu.memory_space<vmem>>, vector<8x3xi32>
    %3 = vector.extract_strided_slice %1 {offsets = [0, 0], sizes = [8, 1], strides = [1, 1]} : vector<8x4xi32> to vector<8x1xi32>
    %c0_i32 = arith.constant 0 : i32
    %4 = vector.broadcast %c0_i32 : i32 to vector<8x1xi32>
    %5 = arith.addi %3, %4 : vector<8x1xi32>
    %6 = vector.broadcast %5 : vector<8x1xi32> to vector<8x128xi32>
    %7 = arith.cmpi eq, %0, %6 : vector<8x128xi32>
    %8 = arith.extui %7 : vector<8x128xi1> to vector<8x128xi32>
    %9 = arith.sitofp %8 : vector<8x128xi32> to vector<8x128xf32>
    %10 = vector.extract_strided_slice %1 {offsets = [0, 1], sizes = [8, 1], strides = [1, 1]} : vector<8x4xi32> to vector<8x1xi32>
    %c0_i32_3 = arith.constant 0 : i32
    %11 = vector.broadcast %c0_i32_3 : i32 to vector<8x1xi32>
    %12 = arith.addi %10, %11 : vector<8x1xi32>
    %13 = vector.broadcast %12 : vector<8x1xi32> to vector<8x128xi32>
    %14 = arith.cmpi eq, %0, %13 : vector<8x128xi32>
    %15 = arith.extui %14 : vector<8x128xi1> to vector<8x128xi32>
    %16 = arith.sitofp %15 : vector<8x128xi32> to vector<8x128xf32>
    %17 = arith.addf %9, %16 : vector<8x128xf32>
    %18 = vector.extract_strided_slice %1 {offsets = [0, 2], sizes = [8, 1], strides = [1, 1]} : vector<8x4xi32> to vector<8x1xi32>
    %c0_i32_4 = arith.constant 0 : i32
    %19 = vector.broadcast %c0_i32_4 : i32 to vector<8x1xi32>
    %20 = arith.addi %18, %19 : vector<8x1xi32>
    %21 = vector.broadcast %20 : vector<8x1xi32> to vector<8x128xi32>
    %22 = arith.cmpi eq, %0, %21 : vector<8x128xi32>
    %23 = arith.extui %22 : vector<8x128xi1> to vector<8x128xi32>
    %24 = arith.sitofp %23 : vector<8x128xi32> to vector<8x128xf32>
    %25 = arith.addf %17, %24 : vector<8x128xf32>
    %26 = vector.extract_strided_slice %1 {offsets = [0, 3], sizes = [8, 1], strides = [1, 1]} : vector<8x4xi32> to vector<8x1xi32>
    %c32_i32 = arith.constant 32 : i32
    %27 = vector.broadcast %c32_i32 : i32 to vector<8x1xi32>
    %28 = arith.addi %26, %27 : vector<8x1xi32>
    %29 = vector.broadcast %28 : vector<8x1xi32> to vector<8x128xi32>
    %30 = arith.cmpi eq, %0, %29 : vector<8x128xi32>
    %31 = arith.extui %30 : vector<8x128xi1> to vector<8x128xi32>
    %32 = arith.sitofp %31 : vector<8x128xi32> to vector<8x128xf32>
    %33 = arith.addf %25, %32 : vector<8x128xf32>
    %34 = vector.extract_strided_slice %2 {offsets = [0, 0], sizes = [8, 1], strides = [1, 1]} : vector<8x3xi32> to vector<8x1xi32>
    %c0_i32_5 = arith.constant 0 : i32
    %35 = vector.broadcast %c0_i32_5 : i32 to vector<8x1xi32>
    %36 = arith.addi %34, %35 : vector<8x1xi32>
    %37 = vector.broadcast %36 : vector<8x1xi32> to vector<8x128xi32>
    %38 = arith.cmpi eq, %0, %37 : vector<8x128xi32>
    %39 = arith.extui %38 : vector<8x128xi1> to vector<8x128xi32>
    %40 = arith.sitofp %39 : vector<8x128xi32> to vector<8x128xf32>
    %41 = vector.extract_strided_slice %2 {offsets = [0, 1], sizes = [8, 1], strides = [1, 1]} : vector<8x3xi32> to vector<8x1xi32>
    %c0_i32_6 = arith.constant 0 : i32
    %42 = vector.broadcast %c0_i32_6 : i32 to vector<8x1xi32>
    %43 = arith.addi %41, %42 : vector<8x1xi32>
    %44 = vector.broadcast %43 : vector<8x1xi32> to vector<8x128xi32>
    %45 = arith.cmpi eq, %0, %44 : vector<8x128xi32>
    %46 = arith.extui %45 : vector<8x128xi1> to vector<8x128xi32>
    %47 = arith.sitofp %46 : vector<8x128xi32> to vector<8x128xf32>
    %48 = arith.addf %40, %47 : vector<8x128xf32>
    %49 = vector.extract_strided_slice %2 {offsets = [0, 2], sizes = [8, 1], strides = [1, 1]} : vector<8x3xi32> to vector<8x1xi32>
    %c0_i32_7 = arith.constant 0 : i32
    %50 = vector.broadcast %c0_i32_7 : i32 to vector<8x1xi32>
    %51 = arith.addi %49, %50 : vector<8x1xi32>
    %52 = vector.broadcast %51 : vector<8x1xi32> to vector<8x128xi32>
    %53 = arith.cmpi eq, %0, %52 : vector<8x128xi32>
    %54 = arith.extui %53 : vector<8x128xi1> to vector<8x128xi32>
    %55 = arith.sitofp %54 : vector<8x128xi32> to vector<8x128xf32>
    %56 = arith.addf %48, %55 : vector<8x128xf32>
    %c0_8 = arith.constant 0 : index
    %c0_9 = arith.constant 0 : index
    %57 = vector.load %arg3[%c0_8, %c0_9] : memref<8x128xf32, #tpu.memory_space<vmem>>, vector<8x128xf32>
    %58 = arith.addf %56, %57 : vector<8x128xf32>
    %59 = tpu.concatenate %33, %58 in 0 : vector<8x128xf32>, vector<8x128xf32> -> vector<16x128xf32>
    %c0_10 = arith.constant 0 : index
    %c0_11 = arith.constant 0 : index
    %60 = vector.load %arg4[%c0_10, %c0_11] : memref<128x128xf32, #tpu.memory_space<vmem>>, vector<128x128xf32>
    %cst = arith.constant dense<0.000000e+00> : vector<16x128xf32>
    %61 = tpu.matmul %59, %60, %cst {dimension_numbers = #tpu.dot_dimension_numbers<[1], [0], [0], [1], [0, 0, 1, 1], [], []>} : vector<16x128xf32>, vector<128x128xf32>, vector<16x128xf32> -> vector<16x128xf32>
    %62 = vector.extract_strided_slice %61 {offsets = [0, 0], sizes = [8, 128], strides = [1, 1]} : vector<16x128xf32> to vector<8x128xf32>
    %c0_12 = arith.constant 0 : index
    %c0_13 = arith.constant 0 : index
    %63 = vector.load %arg5[%c0_12, %c0_13] : memref<8x128xf32, #tpu.memory_space<vmem>>, vector<8x128xf32>
    tpu.vector_store %arg5[%c0_12, %c0_13], %62 {strides = array<i32>} : memref<8x128xf32, #tpu.memory_space<vmem>>, vector<8x128xf32>,
    %64 = vector.extract_strided_slice %61 {offsets = [8, 0], sizes = [8, 128], strides = [1, 1]} : vector<16x128xf32> to vector<8x128xf32>
    %c0_14 = arith.constant 0 : index
    %c0_15 = arith.constant 0 : index
    %65 = vector.load %arg6[%c0_14, %c0_15] : memref<8x128xf32, #tpu.memory_space<vmem>>, vector<8x128xf32>
    tpu.vector_store %arg6[%c0_14, %c0_15], %64 {strides = array<i32>} : memref<8x128xf32, #tpu.memory_space<vmem>>, vector<8x128xf32>,
    return
  }
  func.func @transform_0(%arg0: i32) -> (i32, i32) {
    %c0_i32 = arith.constant 0 : i32
    %c0_i32_0 = arith.constant 0 : i32
    return %arg0, %c0_i32 : i32, i32
  }
  func.func @transform_1(%arg0: i32) -> (i32, i32) {
    %c0_i32 = arith.constant 0 : i32
    %c0_i32_0 = arith.constant 0 : i32
    return %arg0, %c0_i32 : i32, i32
  }
  func.func @transform_2(%arg0: i32) -> (i32, i32) {
    %c0_i32 = arith.constant 0 : i32
    %c0_i32_0 = arith.constant 0 : i32
    return %arg0, %c0_i32 : i32, i32
  }
  func.func @transform_3(%arg0: i32) -> (i32, i32) {
    %c0_i32 = arith.constant 0 : i32
    %c0_i32_0 = arith.constant 0 : i32
    %c0_i32_1 = arith.constant 0 : i32
    return %c0_i32, %c0_i32_0 : i32, i32
  }
  func.func @transform_4(%arg0: i32) -> (i32, i32) {
    %c0_i32 = arith.constant 0 : i32
    %c0_i32_0 = arith.constant 0 : i32
    return %arg0, %c0_i32 : i32, i32
  }
  func.func @transform_5(%arg0: i32) -> (i32, i32) {
    %c0_i32 = arith.constant 0 : i32
    %c0_i32_0 = arith.constant 0 : i32
    return %arg0, %c0_i32 : i32, i32
  }
}

</mosaic_0001>

<llo_original>
// kernel: emb_forward.1
$region0: #{emb_forward.1}
  #allocation0 [shape = 'u32[]', space=smem, size = 0x4, offset = 0x4, fixed_abs, tag = 'smem constant byte address 0x4 - core index']
  #allocation1 [shape = 'u32[144,128]{1,0:T(1,128)}', space=vmem, size = 0x12000, scoped, tag = 'internal scratch']
  %s0 = inlined_call_operand.vmem [shape: s32[16,4], index: 0, kind: input, shape index: {}]
  %s1 = inlined_call_operand.vmem [shape: s32[16,3], index: 1, kind: input, shape index: {}]
  %s2 = inlined_call_operand.vmem [shape: f32[16,128], index: 2, kind: input, shape index: {}]
  %s3 = inlined_call_operand.vmem [shape: f32[128,128], index: 3, kind: input, shape index: {}]
  %s4 = inlined_call_operand.hbm [shape: f32[16,128], index: 4, kind: output, shape index: {0}]
  %s5 = inlined_call_operand.hbm [shape: f32[16,128], index: 5, kind: output, shape index: {1}]
  %6 = xla_tuple %s4, %s5
  %s7 = sld [smem:[#allocation0]]
  $region57: #{emb_forward.1} parent=0
    _
  %s9 = ssub.s32 1, %s7
  %s10 = scalar_select 0, %s9, %s7
  $region1: #{emb_forward.1} parent=0
    #allocation2 [shape = 'u8[8192]{0}', space=vmem, size = 0x2000, scoped, tag = 'output window, operand 0']
    #allocation3 [shape = 's32[2]{0}', space=sflag, size = 0x8, scoped, tag = 'scoped memory for emb_forward.1']
    #allocation4 [shape = 'u8[8192]{0}', space=vmem, size = 0x2000, scoped, tag = 'output window, operand 1']
    #allocation5 [shape = 's32[2]{0}', space=sflag, size = 0x8, scoped, tag = 'scoped memory for emb_forward.1']
    %11 = vsyncpa [#allocation3], 0
    %s12 = scalar_lea.sflag [#allocation3], 1
    %13 = vsyncpa %s12, 0
    %14 = vsyncpa [#allocation5], 0
    %s15 = scalar_lea.sflag [#allocation5], 1
    %16 = vsyncpa %s15, 0
    loop: start=0, step=1, limit=4
    $region2: #{emb_forward.1} parent=1 // loop_pre_header
      _
    $region3: #{emb_forward.1} parent=1 // loop_header
      %s18 = sphi 0, %s22
      %p19 = scmp.ge.s32.totalorder %s18, 4
      %s28 = sphi 0, %s30
      %s31 = sphi 0, %s28
      %s32 = sphi 0, %s31
      %s48 = sphi 0, %s32
      %s54 = sphi 0, %s56
      %s57 = sphi 0, %s54
      %s58 = sphi 0, %s57
      %s74 = sphi 0, %s58
      %s80 = sphi 0, %s82
      %s83 = sphi 0, %s80
      %s84 = sphi 0, %s83
      %s100 = sphi 0, %s84
      %s104 = sphi 0, %s104
      %s106 = sphi 0, %s104
      %s107 = sphi 0, %s106
      %s121 = sphi 0, %s107
      %s127 = sphi 0, %s129
      %s130 = sphi 0, %s127
      %s131 = sphi 0, %s130
      %s147 = sphi 0, %s131
      %s153 = sphi 0, %s155
      %s156 = sphi 0, %s153
      %s157 = sphi 0, %s156
      %s173 = sphi 0, %s157
    $region4: #{emb_forward.1} parent=1 // loop_header_branch
      %21 = sbr.rel (%p19) target = $region8
    $region5: #{emb_forward.1} parent=1 // loop_body
      %s23 = ssub.s32 %s18, 1
      %s24 = ssub.s32 %s18, 2
      %s25 = sadd.s32 %s18, 1
      %s26 = ssub.s32 %s18, %s25
      %p27 = scmp.eq.s32.totalorder %s26, 0
      %s29 = sadd.s32 %s28, 1
      %s30 = scalar_select %p27, %s28, %s29
      %p33 = pneg %p27
      %p34 = scmp.eq.s32.totalorder %s18, 1
      %p35 = por %p33, %p34
      %p36 = scmp.ne.s32.totalorder %s28, %s31
      %p37 = scmp.eq.s32.totalorder %s18, 0
      %p38 = por %p36, %p37
      %p39 = scmp.ne.s32.totalorder %s28, %s31
      %p40 = scmp.eq.s32.totalorder %s23, 1
      %p41 = por %p39, %p40
      %p42 = scmp.ne.s32.totalorder %s31, %s32
      %p43 = scmp.eq.s32.totalorder %s23, 0
      %p44 = por %p42, %p43
      %p45 = scmp.ne.s32.totalorder %s31, %s32
      %p46 = scmp.eq.s32.totalorder %s24, 1
      %p47 = por %p45, %p46
      %p49 = scmp.ne.s32.totalorder %s32, %s48
      %p50 = scmp.eq.s32.totalorder %s24, 0
      %p51 = por %p49, %p50
      %s52 = ssub.s32 %s18, %s25
      %p53 = scmp.eq.s32.totalorder %s52, 0
      %s55 = sadd.s32 %s54, 1
      %s56 = scalar_select %p53, %s54, %s55
      %p59 = pneg %p53
      %p60 = scmp.eq.s32.totalorder %s18, 1
      %p61 = por %p59, %p60
      %p62 = scmp.ne.s32.totalorder %s54, %s57
      %p63 = scmp.eq.s32.totalorder %s18, 0
      %p64 = por %p62, %p63
      %p65 = scmp.ne.s32.totalorder %s54, %s57
      %p66 = scmp.eq.s32.totalorder %s23, 1
      %p67 = por %p65, %p66
      %p68 = scmp.ne.s32.totalorder %s57, %s58
      %p69 = scmp.eq.s32.totalorder %s23, 0
      %p70 = por %p68, %p69
      %p71 = scmp.ne.s32.totalorder %s57, %s58
      %p72 = scmp.eq.s32.totalorder %s24, 1
      %p73 = por %p71, %p72
      %p75 = scmp.ne.s32.totalorder %s58, %s74
      %p76 = scmp.eq.s32.totalorder %s24, 0
      %p77 = por %p75, %p76
      %s78 = ssub.s32 %s18, %s25
      %p79 = scmp.eq.s32.totalorder %s78, 0
      %s81 = sadd.s32 %s80, 1
      %s82 = scalar_select %p79, %s80, %s81
      %p85 = pneg %p79
      %p86 = scmp.eq.s32.totalorder %s18, 1
      %p87 = por %p85, %p86
      %p88 = scmp.ne.s32.totalorder %s80, %s83
      %p89 = scmp.eq.s32.totalorder %s18, 0
      %p90 = por %p88, %p89
      %p91 = scmp.ne.s32.totalorder %s80, %s83
      %p92 = scmp.eq.s32.totalorder %s23, 1
      %p93 = por %p91, %p92
      %p94 = scmp.ne.s32.totalorder %s83, %s84
      %p95 = scmp.eq.s32.totalorder %s23, 0
      %p96 = por %p94, %p95
      %p97 = scmp.ne.s32.totalorder %s83, %s84
      %p98 = scmp.eq.s32.totalorder %s24, 1
      %p99 = por %p97, %p98
      %p101 = scmp.ne.s32.totalorder %s84, %s100
      %p102 = scmp.eq.s32.totalorder %s24, 0
      %p103 = por %p101, %p102
      %s105 = sadd.s32 %s104, 1
      %p108 = scmp.eq.s32.totalorder %s18, 1
      %p109 = scmp.ne.s32.totalorder %s104, %s106
      %p110 = scmp.eq.s32.totalorder %s18, 0
      %p111 = por %p109, %p110
      %p112 = scmp.ne.s32.totalorder %s104, %s106
      %p113 = scmp.eq.s32.totalorder %s23, 1
      %p114 = por %p112, %p113
      %p115 = scmp.ne.s32.totalorder %s106, %s107
      %p116 = scmp.eq.s32.totalorder %s23, 0
      %p117 = por %p115, %p116
      %p118 = scmp.ne.s32.totalorder %s106, %s107
      %p119 = scmp.eq.s32.totalorder %s24, 1
      %p120 = por %p118, %p119
      %p122 = scmp.ne.s32.totalorder %s107, %s121
      %p123 = scmp.eq.s32.totalorder %s24, 0
      %p124 = por %p122, %p123
      %s125 = ssub.s32 %s18, %s25
      %p126 = scmp.eq.s32.totalorder %s125, 0
      %s128 = sadd.s32 %s127, 1
      %s129 = scalar_select %p126, %s127, %s128
      %p132 = pneg %p126
      %p133 = scmp.eq.s32.totalorder %s18, 1
      %p134 = por %p132, %p133
      %p135 = scmp.ne.s32.totalorder %s127, %s130
      %p136 = scmp.eq.s32.totalorder %s18, 0
      %p137 = por %p135, %p136
      %p138 = scmp.ne.s32.totalorder %s127, %s130
      %p139 = scmp.eq.s32.totalorder %s23, 1
      %p140 = por %p138, %p139
      %p141 = scmp.ne.s32.totalorder %s130, %s131
      %p142 = scmp.eq.s32.totalorder %s23, 0
      %p143 = por %p141, %p142
      %p144 = scmp.ne.s32.totalorder %s130, %s131
      %p145 = scmp.eq.s32.totalorder %s24, 1
      %p146 = por %p144, %p145
      %p148 = scmp.ne.s32.totalorder %s131, %s147
      %p149 = scmp.eq.s32.totalorder %s24, 0
      %p150 = por %p148, %p149
      %s151 = ssub.s32 %s18, %s25
      %p152 = scmp.eq.s32.totalorder %s151, 0
      %s154 = sadd.s32 %s153, 1
      %s155 = scalar_select %p152, %s153, %s154
      %p158 = pneg %p152
      %p159 = scmp.eq.s32.totalorder %s18, 1
      %p160 = por %p158, %p159
      %p161 = scmp.ne.s32.totalorder %s153, %s156
      %p162 = scmp.eq.s32.totalorder %s18, 0
      %p163 = por %p161, %p162
      %p164 = scmp.ne.s32.totalorder %s153, %s156
      %p165 = scmp.eq.s32.totalorder %s23, 1
      %p166 = por %p164, %p165
      %p167 = scmp.ne.s32.totalorder %s156, %s157
      %p168 = scmp.eq.s32.totalorder %s23, 0
      %p169 = por %p167, %p168
      %p170 = scmp.ne.s32.totalorder %s156, %s157
      %p171 = scmp.eq.s32.totalorder %s24, 1
      %p172 = por %p170, %p171
      %p174 = scmp.ne.s32.totalorder %s157, %s173
      %p175 = scmp.eq.s32.totalorder %s24, 0
      %p176 = por %p174, %p175
      %p177 = scmp.le.s32.totalorder 1, %s18
      %p178 = scmp.lt.s32.totalorder %s18, 3
      %p179 = pnand %p177, %p178
      %p180 = pneg %p179
      // Predicated region
      $region9: #{emb_forward.1} parent=5 // pred_check
        _
      $region10: #{emb_forward.1} parent=5 // pred_check_branch
        %182 = sbr.rel (%p179) target = $region12
      $region11: #{emb_forward.1} parent=5 // pred_region
        %s183 = ssub.s32 %s18, 1
        // Predicated region
        $region13: #{emb_forward.1} parent=11 // pred_check
          %p184 = pneg %p117
        $region14: #{emb_forward.1} parent=11 // pred_check_branch
          %186 = sbr.rel (%p184) target = $region16
        $region15: #{emb_forward.1} parent=11 // pred_region
          _
        $region16: #{emb_forward.1} parent=11 // pred_fallthru
          _
      $region12: #{emb_forward.1} parent=5 // pred_fallthru
        _
      %p187 = scmp.lt.s32.totalorder %s18, 2
      // Predicated region
      $region17: #{emb_forward.1} parent=5 // pred_check
        %p188 = pneg %p187
      $region18: #{emb_forward.1} parent=5 // pred_check_branch
        %190 = sbr.rel (%p188) target = $region20
      $region19: #{emb_forward.1} parent=5 // pred_region
        // Predicated region
        $region21: #{emb_forward.1} parent=19 // pred_check
          %p191 = pneg %p38
        $region22: #{emb_forward.1} parent=19 // pred_check_branch
          %193 = sbr.rel (%p191) target = $region24
        $region23: #{emb_forward.1} parent=19 // pred_region
          %p194 = scmp.lt.s32.totalorder %s18, 1
          %s195 = scalar_select %p194, %s18, 1
          %s196 = smul.addr %s195, 8
          %s197 = scalar_lea.vmem %s0, %s196
        $region24: #{emb_forward.1} parent=19 // pred_fallthru
          _
        // Predicated region
        $region25: #{emb_forward.1} parent=19 // pred_check
          %p198 = pneg %p64
        $region26: #{emb_forward.1} parent=19 // pred_check_branch
          %200 = sbr.rel (%p198) target = $region28
        $region27: #{emb_forward.1} parent=19 // pred_region
          %p201 = scmp.lt.s32.totalorder %s18, 1
          %s202 = scalar_select %p201, %s18, 1
          %s203 = smul.addr %s202, 8
          %s204 = scalar_lea.vmem %s1, %s203
        $region28: #{emb_forward.1} parent=19 // pred_fallthru
          _
        // Predicated region
        $region29: #{emb_forward.1} parent=19 // pred_check
          %p205 = pneg %p90
        $region30: #{emb_forward.1} parent=19 // pred_check_branch
          %207 = sbr.rel (%p205) target = $region32
        $region31: #{emb_forward.1} parent=19 // pred_region
          %p208 = scmp.lt.s32.totalorder %s18, 1
          %s209 = scalar_select %p208, %s18, 1
          %s210 = smul.addr %s209, 8
          %s211 = scalar_lea.vmem %s2, %s210
        $region32: #{emb_forward.1} parent=19 // pred_fallthru
          _
      $region20: #{emb_forward.1} parent=5 // pred_fallthru
        _
      %p212 = scmp.le.s32.totalorder 1, %s18
      %p213 = scmp.lt.s32.totalorder %s18, 3
      %p214 = pnand %p212, %p213
      %p215 = pneg %p214
      // Predicated region
      $region33: #{emb_forward.1} parent=5 // pred_check
        _
      $region34: #{emb_forward.1} parent=5 // pred_check_branch
        %217 = sbr.rel (%p214) target = $region36
      $region35: #{emb_forward.1} parent=5 // pred_region
        %s218 = ssub.s32 %s18, 1
        %p219 = scmp.lt.s32.totalorder %s23, 1
        %s220 = scalar_select %p219, %s23, 1
        %s221 = smul.addr %s220, 8
        %s222 = scalar_lea.vmem %s0, %s221
        %p223 = pneg %p44
        %p224 = pneg %p41
        %p225 = scmp.lt.s32.totalorder %s23, 1
        %s226 = scalar_select %p225, %s23, 1
        %s227 = smul.addr %s226, 8
        %s228 = scalar_lea.vmem %s1, %s227
        %p229 = pneg %p70
        %p230 = pneg %p67
        %p231 = scmp.lt.s32.totalorder %s23, 1
        %s232 = scalar_select %p231, %s23, 1
        %s233 = smul.addr %s232, 8
        %s234 = scalar_lea.vmem %s2, %s233
        %p235 = pneg %p96
        %p236 = pneg %p93
        %p237 = pneg %p117
        %p238 = pneg %p114
        %p239 = pneg %p143
        %p240 = pneg %p140
        %s241 = sand.u32 %s130, 1
        %s242 = scalar_lea.sflag [#allocation3], %s241
        %s243 = sand.u32 %s130, 1
        %s244 = smul.addr %s243, 8
        %s245 = scalar_lea.vmem [#allocation2], %s244
        %p246 = pneg %p169
        %p247 = pneg %p166
        %s248 = sand.u32 %s156, 1
        %s249 = scalar_lea.sflag [#allocation5], %s248
        %s250 = sand.u32 %s156, 1
        %s251 = smul.addr %s250, 8
        %s252 = scalar_lea.vmem [#allocation4], %s251
        %p253 = scmp.lt.s32.totalorder %s23, 1
        %s254 = scalar_select %p253, %s23, 1
        %s255 = smul.addr %s254, 8
        %s256 = scalar_lea.vmem %s0, %s255
        %p257 = scmp.lt.s32.totalorder %s23, 1
        %s258 = scalar_select %p257, %s23, 1
        %s259 = smul.addr %s258, 8
        %s260 = scalar_lea.vmem %s1, %s259
        %p261 = scmp.lt.s32.totalorder %s23, 1
        %s262 = scalar_select %p261, %s23, 1
        %s263 = smul.addr %s262, 8
        %s264 = scalar_lea.vmem %s2, %s263
        %v265 = vlaneseq
        %v266 = vand.u32 %v265, 127
        %v267 = vld [vmem:[%s256] sm:$0xff]
        %v268 = vld [vmem:[%s260] sm:$0xff]
        %269 = vset.pattern.permute.xlu0 0
        %270 = vperm.xlu0 %269, %v267
        %v271 = vpop.permute.xlu0 %270
        %vm272 = vcmp.eq.s32.totalorder %v266, %v271
        %v273 = vsel %vm272, 1, 0
        %v274 = vcvt.s32.f32 %v273
        %275 = vset.pattern.permute.xlu0 1
        %276 = vperm.xlu0 %275, %v267
        %v277 = vpop.permute.xlu0 %276
        %vm278 = vcmp.eq.s32.totalorder %v266, %v277
        %v279 = vsel %vm278, 1, 0
        %v280 = vcvt.s32.f32 %v279
        %v281 = vadd.f32 %v274, %v280
        %282 = vset.pattern.permute.xlu0 2
        %283 = vperm.xlu0 %282, %v267
        %v284 = vpop.permute.xlu0 %283
        %vm285 = vcmp.eq.s32.totalorder %v266, %v284
        %v286 = vsel %vm285, 1, 0
        %v287 = vcvt.s32.f32 %v286
        %v288 = vadd.f32 %v281, %v287
        %v289 = vadd.s32 %v267, 32
        %290 = vset.pattern.permute.xlu0 3
        %291 = vperm.xlu0 %290, %v289
        %v292 = vpop.permute.xlu0 %291
        %vm293 = vcmp.eq.s32.totalorder %v266, %v292
        %v294 = vsel %vm293, 1, 0
        %v295 = vcvt.s32.f32 %v294
        %v296 = vadd.f32 %v288, %v295
        %297 = vset.pattern.permute.xlu0 0
        %298 = vperm.xlu0 %297, %v268
        %v299 = vpop.permute.xlu0 %298
        %vm300 = vcmp.eq.s32.totalorder %v266, %v299
        %v301 = vsel %vm300, 1, 0
        %v302 = vcvt.s32.f32 %v301
        %303 = vset.pattern.permute.xlu0 1
        %304 = vperm.xlu0 %303, %v268
        %v305 = vpop.permute.xlu0 %304
        %vm306 = vcmp.eq.s32.totalorder %v266, %v305
        %v307 = vsel %vm306, 1, 0
        %v308 = vcvt.s32.f32 %v307
        %v309 = vadd.f32 %v302, %v308
        %310 = vset.pattern.permute.xlu0 2
        %311 = vperm.xlu0 %310, %v268
        %v312 = vpop.permute.xlu0 %311
        %vm313 = vcmp.eq.s32.totalorder %v266, %v312
        %v314 = vsel %vm313, 1, 0
        %v315 = vcvt.s32.f32 %v314
        %v316 = vadd.f32 %v309, %v315
        %v317 = vld [vmem:[%s264] sm:$0xff]
        %v318 = vadd.f32 %v316, %v317
        %v319 = vld [vmem:[%s3] sm:$0xff]
        %v320 = vld [vmem:[%s3 + $0x8] sm:$0xff]
        %v321 = vld [vmem:[%s3 + $0x10] sm:$0xff]
        %v322 = vld [vmem:[%s3 + $0x18] sm:$0xff]
        %v323 = vld [vmem:[%s3 + $0x20] sm:$0xff]
        %v324 = vld [vmem:[%s3 + $0x28] sm:$0xff]
        %v325 = vld [vmem:[%s3 + $0x30] sm:$0xff]
        %v326 = vld [vmem:[%s3 + $0x38] sm:$0xff]
        %v327 = vld [vmem:[%s3 + $0x40] sm:$0xff]
        %v328 = vld [vmem:[%s3 + $0x48] sm:$0xff]
        %v329 = vld [vmem:[%s3 + $0x50] sm:$0xff]
        %v330 = vld [vmem:[%s3 + $0x58] sm:$0xff]
        %v331 = vld [vmem:[%s3 + $0x60] sm:$0xff]
        %v332 = vld [vmem:[%s3 + $0x68] sm:$0xff]
        %v333 = vld [vmem:[%s3 + $0x70] sm:$0xff]
        %v334 = vld [vmem:[%s3 + $0x78] sm:$0xff]
        %335 = vmatprep.subr.mxu0 0.0
        %336 = vmatpush1.msra.mxu0 %v319
        %337 = vmatprep.subr.mxu0 0.0
        %338 = vmatpush1.msra.mxu0 %v320
        %339 = vmatprep.subr.mxu0 0.0
        %340 = vmatpush1.msra.mxu0 %v321
        %341 = vmatprep.subr.mxu0 0.0
        %342 = vmatpush1.msra.mxu0 %v322
        %343 = vmatprep.subr.mxu0 0.0
        %344 = vmatpush1.msra.mxu0 %v323
        %345 = vmatprep.subr.mxu0 0.0
        %346 = vmatpush1.msra.mxu0 %v324
        %347 = vmatprep.subr.mxu0 0.0
        %348 = vmatpush1.msra.mxu0 %v325
        %349 = vmatprep.subr.mxu0 0.0
        %350 = vmatpush1.msra.mxu0 %v326
        %351 = vmatprep.subr.mxu0 0.0
        %352 = vmatpush1.msra.mxu0 %v327
        %353 = vmatprep.subr.mxu0 0.0
        %354 = vmatpush1.msra.mxu0 %v328
        %355 = vmatprep.subr.mxu0 0.0
        %356 = vmatpush1.msra.mxu0 %v329
        %357 = vmatprep.subr.mxu0 0.0
        %358 = vmatpush1.msra.mxu0 %v330
        %359 = vmatprep.subr.mxu0 0.0
        %360 = vmatpush1.msra.mxu0 %v331
        %361 = vmatprep.subr.mxu0 0.0
        %362 = vmatpush1.msra.mxu0 %v332
        %363 = vmatprep.subr.mxu0 0.0
        %364 = vmatpush1.msra.mxu0 %v333
        %365 = vmatprep.subr.mxu0 0.0
        %366 = vmatpush1.msra.mxu0 %v334
        %367 = vmatprep.subr.mxu0 0.0
        %368 = vmatpush1.msra.mxu0 0.0
        %369 = vmatprep.subr.mxu0 0.0
        %370 = vmatpush1.msra.mxu0 0.0
        %371 = vmatprep.subr.mxu0 0.0
        %372 = vmatpush1.msra.mxu0 0.0
        %373 = vmatprep.subr.mxu0 0.0
        %374 = vmatpush1.msra.mxu0 0.0
        %375 = vmatprep.subr.mxu0 0.0
        %376 = vmatpush1.msra.mxu0 0.0
        %377 = vmatprep.subr.mxu0 0.0
        %378 = vmatpush1.msra.mxu0 0.0
        %379 = vmatprep.subr.mxu0 0.0
        %380 = vmatpush1.msra.mxu0 0.0
        %381 = vmatprep.subr.mxu0 0.0
        %382 = vmatpush1.msra.mxu0 0.0
        %383 = vmatprep.subr.mxu0 0.0
        %384 = vmatpush1.msra.mxu0 0.0
        %385 = vmatprep.subr.mxu0 0.0
        %386 = vmatpush1.msra.mxu0 0.0
        %387 = vmatprep.subr.mxu0 0.0
        %388 = vmatpush1.msra.mxu0 0.0
        %389 = vmatprep.subr.mxu0 0.0
        %390 = vmatpush1.msra.mxu0 0.0
        %391 = vmatprep.subr.mxu0 0.0
        %392 = vmatpush1.msra.mxu0 0.0
        %393 = vmatprep.subr.mxu0 0.0
        %394 = vmatpush1.msra.mxu0 0.0
        %395 = vmatprep.subr.mxu0 0.0
        %396 = vmatpush1.msra.mxu0 0.0
        %397 = vmatprep.subr.mxu0 0.0
        %398 = vmatpush1.msra.mxu0 0.0
        %399 = vmatprep.mubr.f32.mxu0 0.0
        %400 = vmatmul.mubr.f32.gmra.mrb[0].mxu0 %v296
        %v401 = vpop.f32.mrb[0].mxu0
        %v402 = vadd.f32 0.0, %v401
        %v403 = vpop.f32.mrb[0].mxu0
        %404 = vmatprep.mubr.f32.mxu0 0.0
        %405 = vmatmul.mubr.f32.gmra.mrb[0].mxu0 %v318
        %v406 = vpop.f32.mrb[0].mxu0
        %v407 = vadd.f32 0.0, %v406
        %v408 = vpop.f32.mrb[0].mxu0
        %409 = vdwg.mxu0
        %410 = vst [vmem:[%s245] sm:$0xff] %v402
        %411 = vst [vmem:[%s252] sm:$0xff] %v407
        %s412 = sand.u32 %s130, 1
        %s413 = scalar_lea.sflag [#allocation3], %s412
        %s414 = sand.u32 %s130, 1
        %s415 = smul.addr %s414, 8
        %s416 = scalar_lea.vmem [#allocation2], %s415
        %s417 = sand.u32 %s156, 1
        %s418 = scalar_lea.sflag [#allocation5], %s417
        %s419 = sand.u32 %s156, 1
        %s420 = smul.addr %s419, 8
        %s421 = scalar_lea.vmem [#allocation4], %s420
        // Predicated region
        $region37: #{emb_forward.1} parent=35 // pred_check
          %p422 = pneg %p140
        $region38: #{emb_forward.1} parent=35 // pred_check_branch
          %424 = sbr.rel (%p422) target = $region40
        $region39: #{emb_forward.1} parent=35 // pred_region
          %s426 = ssub.s32 128, 128
          %427 = vsyncadd %s413, %s426
          %s428 = smul.addr %s23, 128
          %s429 = scalar_lea.hbm %s4, %s428
          %s431 = sshll.u32 %s416, 4
          %s432 = int_to_ptr.vmem [resolvable:$true] %s431
          %434 = dma.vmem_to_hbm [thread:$0]  %s432, 128, %s429, %s413
        $region40: #{emb_forward.1} parent=35 // pred_fallthru
          _
        // Predicated region
        $region41: #{emb_forward.1} parent=35 // pred_check
          %p435 = pneg %p166
        $region42: #{emb_forward.1} parent=35 // pred_check_branch
          %437 = sbr.rel (%p435) target = $region44
        $region43: #{emb_forward.1} parent=35 // pred_region
          %s439 = ssub.s32 128, 128
          %440 = vsyncadd %s418, %s439
          %s441 = smul.addr %s23, 128
          %s442 = scalar_lea.hbm %s5, %s441
          %s444 = sshll.u32 %s421, 4
          %s445 = int_to_ptr.vmem [resolvable:$true] %s444
          %447 = dma.vmem_to_hbm [thread:$0]  %s445, 128, %s442, %s418
        $region44: #{emb_forward.1} parent=35 // pred_fallthru
          _
      $region36: #{emb_forward.1} parent=5 // pred_fallthru
        _
      %p448 = scmp.le.s32.totalorder 2, %s18
      // Predicated region
      $region45: #{emb_forward.1} parent=5 // pred_check
        %p449 = pneg %p448
      $region46: #{emb_forward.1} parent=5 // pred_check_branch
        %451 = sbr.rel (%p449) target = $region48
      $region47: #{emb_forward.1} parent=5 // pred_region
        %s452 = ssub.s32 %s18, 2
        // Predicated region
        $region49: #{emb_forward.1} parent=47 // pred_check
          %p453 = pneg %p146
        $region50: #{emb_forward.1} parent=47 // pred_check_branch
          %455 = sbr.rel (%p453) target = $region52
        $region51: #{emb_forward.1} parent=47 // pred_region
          %s456 = sand.u32 %s131, 1
          %s457 = scalar_lea.sflag [#allocation3], %s456
          %s458 = sand.u32 %s131, 1
          %s459 = smul.addr %s458, 8
          %s460 = scalar_lea.vmem [#allocation2], %s459
          %461 = dma.done %s457, 128
        $region52: #{emb_forward.1} parent=47 // pred_fallthru
          _
        // Predicated region
        $region53: #{emb_forward.1} parent=47 // pred_check
          %p462 = pneg %p172
        $region54: #{emb_forward.1} parent=47 // pred_check_branch
          %464 = sbr.rel (%p462) target = $region56
        $region55: #{emb_forward.1} parent=47 // pred_region
          %s465 = sand.u32 %s157, 1
          %s466 = scalar_lea.sflag [#allocation5], %s465
          %s467 = sand.u32 %s157, 1
          %s468 = smul.addr %s467, 8
          %s469 = scalar_lea.vmem [#allocation4], %s468
          %470 = dma.done %s466, 128
        $region56: #{emb_forward.1} parent=47 // pred_fallthru
          _
      $region48: #{emb_forward.1} parent=5 // pred_fallthru
        _
    $region6: #{emb_forward.1} parent=1 // loop_footer
      %s22 = sadd.s32 1, %s18
    $region7: #{emb_forward.1} parent=1 // loop_footer_branch
      %17 = sbr.rel target = $region3
    $region8: #{emb_forward.1} parent=1 // loop_exit
      _
    %471 = vsyncpa [#allocation3], 1
    %s472 = scalar_lea.sflag [#allocation3], 1
    %473 = vsyncpa %s472, 1
    %474 = vsyncpa [#allocation5], 1
    %s475 = scalar_lea.sflag [#allocation5], 1
    %476 = vsyncpa %s475, 1

</llo_original>
